<compile_context>
chip_gen: v6e
topology: v6e:2x2x1
jax: 0.10.0
libtpu: 0.0.40
codegen_flags: <defaults>
</compile_context>

<pallas_src>
import functools

import jax
import jax.numpy as jnp
from jax import lax
from jax.experimental import pallas as pl
from jax.experimental.pallas import tpu as pltpu


# -----------------------------------------------------------------------------
# Pallas kernel: whole LSTM recurrence + classification head, single invocation.
# -----------------------------------------------------------------------------
def _lstm_classifier_kernel(x_ref, w_ref, vec_ref, out_ref, *, T, Bp, I, H):
    """
    x_ref   : (T*Bp, I)   time-major input, batch padded to 8 sublanes
    w_ref   : (I+2H+4H, 128) weight slab:
                rows [0, I)          wih   (I, 4H)     gate order i, f, g, o
                rows [I, I+H)        whh   (H, 4H)
                rows [I+H, I+2H)     fc1_w (H, 128)    cols [0,H) valid
                rows [I+2H, I+2H+4H) fc2_w (4H, 128)   rows [0,H), cols [0,C) valid
    vec_ref : (8, 128) vector slab:
                row 0: gate bias (b_ih + b_hh), row 1: fc1_b, row 2: bn_scale,
                row 3: bn_shift, row 4: fc2_b   (all zero-padded to 128 lanes)
    out_ref : (Bp, 128)  lane-dense logits (cols [0,C) valid)
    """
    G = 4 * H

    # --- static, sublane-aligned slab slices ------------------------------------
    r0, r1, r2, r3 = 0, I, I + H, I + 2 * H
    wih = w_ref[r0:r1, :]                       # (I, 4H)
    whh = w_ref[r1:r2, :]                       # (H, 4H)   hoisted once

    vec = vec_ref[...]                          # (8, 128) one vreg
    gate_b = vec[0:1, :]
    fc1_b = vec[1:2, :]
    bn_s = vec[2:3, :]
    bn_sh = vec[3:4, :]
    fc2_b = vec[4:5, :]

    # --- hoisted input projection: all x-gate pre-activations in one matmul -----
    # (T*Bp, I) x (I, 4H) -> (T*Bp, 4H); bias folded in here, off the critical path.
    xw = jnp.dot(x_ref[...], wih, preferred_element_type=jnp.float32) + gate_b

    # --- recurrence: one MXU push (h @ whh) per step on the critical path -------
    h = jnp.zeros((Bp, H), jnp.float32)
    c = jnp.zeros((Bp, H), jnp.float32)
    for t in range(T):  # T static (=8): straight-line unrolled, static vreg slices
        gates = xw[t * Bp:(t + 1) * Bp, :] + jnp.dot(
            h, whh, preferred_element_type=jnp.float32)          # (Bp, 4H)
        sig = jax.nn.sigmoid(gates)            # EUP over the full 128-lane block
        i_g = sig[:, 0 * H:1 * H]
        f_g = sig[:, 1 * H:2 * H]
        o_g = sig[:, 3 * H:4 * H]
        g_g = jnp.tanh(gates[:, 2 * H:3 * H])
        c = f_g * c + i_g * g_g
        h = o_g * jnp.tanh(c)

    # --- classification head: fc1 + ReLU, folded eval-mode BN, fc2 --------------
    fc1_w = w_ref[r2:r3, :]                     # (H, 128)
    fc2_w = w_ref[r3:r3 + G, :]                 # (4H=128, 128)
    z = jnp.dot(h, fc1_w, preferred_element_type=jnp.float32) + fc1_b   # (Bp,128)
    z = jnp.maximum(z, 0.0)
    z = z * bn_s + bn_sh
    # dropout: identity (eval mode)
    logits = jnp.dot(z, fc2_w, preferred_element_type=jnp.float32) + fc2_b
    out_ref[...] = logits.astype(out_ref.dtype)


# -----------------------------------------------------------------------------
# Wrapper: padding, slab packing, parameter folding, pallas_call.
# -----------------------------------------------------------------------------
@functools.partial(jax.jit, static_argnames=("num_classes",))
def lstm_classifier_forward(x, params, *, num_classes):
    """x: (B, T, I) float32, batch_first like PyTorch. Returns logits (B, C)."""
    B, T, I = x.shape
    H = params["fc1_w"].shape[0]
    C = num_classes
    G = 4 * H

    SUB, LANE = 8, 128
    Bp = max(SUB, ((B + SUB - 1) // SUB) * SUB)      # pad batch to sublane width
    Cp = max(LANE, ((C + LANE - 1) // LANE) * LANE)  # pad classes to lane width
    assert G == LANE, "kernel packing assumes 4*hidden_size == 128"

    x = x.astype(jnp.float32)
    # Pad batch (zero rows), go time-major, flatten to (T*Bp, I).
    x_p = jnp.pad(x, ((0, Bp - B), (0, 0), (0, 0)))
    x_slab = jnp.transpose(x_p, (1, 0, 2)).reshape(T * Bp, I)

    # --- weight slab (I + 2H + 4H, 128) -----------------------------------------
    wih = params["w_ih"].T.astype(jnp.float32)                       # (I, 4H)
    whh = params["w_hh"].T.astype(jnp.float32)                       # (H, 4H)
    fc1_wp = jnp.zeros((H, LANE), jnp.float32).at[:, :H].set(
        params["fc1_w"].T.astype(jnp.float32))                       # (H, 128)
    fc2_wp = jnp.zeros((G, LANE), jnp.float32).at[:H, :C].set(
        params["fc2_w"].T.astype(jnp.float32))                       # (4H, 128)
    w_slab = jnp.concatenate([wih, whh, fc1_wp, fc2_wp], axis=0)     # (200, 128)

    # --- vector slab (8, 128) ----------------------------------------------------
    eps = 1e-5
    bn_scale = params["bn_gamma"] / jnp.sqrt(params["bn_var"] + eps)
    bn_shift = params["bn_beta"] - params["bn_mean"] * bn_scale
    vec_slab = jnp.zeros((SUB, LANE), jnp.float32)
    vec_slab = vec_slab.at[0, :G].set(params["b_ih"] + params["b_hh"])
    vec_slab = vec_slab.at[1, :H].set(params["fc1_b"])
    vec_slab = vec_slab.at[2, :H].set(bn_scale)
    vec_slab = vec_slab.at[3, :H].set(bn_shift)
    vec_slab = vec_slab.at[4, :C].set(params["fc2_b"])

    vmem_spec = pl.BlockSpec(memory_space=pltpu.MemorySpace.VMEM)
    kernel = functools.partial(_lstm_classifier_kernel, T=T, Bp=Bp, I=I, H=H)

    out = pl.pallas_call(
        kernel,
        out_shape=jax.ShapeDtypeStruct((Bp, Cp), jnp.float32),
        in_specs=[vmem_spec, vmem_spec, vmem_spec],
        out_specs=vmem_spec,
    )(x_slab, w_slab, vec_slab)

    return out[:B, :C]


# -----------------------------------------------------------------------------
# Pure-JAX reference (mirrors PyTorch eval-mode forward) for verification.
# -----------------------------------------------------------------------------
def reference_forward(x, params):
    B, T, I = x.shape
    H = params["fc1_w"].shape[0]
    w_ih, w_hh = params["w_ih"], params["w_hh"]
    b = params["b_ih"] + params["b_hh"]

    def step(carry, x_t):
        h, c = carry
        gates = x_t @ w_ih.T + h @ w_hh.T + b          # (B, 4H)
        i = jax.nn.sigmoid(gates[:, 0:H])
        f = jax.nn.sigmoid(gates[:, H:2 * H])
        g = jnp.tanh(gates[:, 2 * H:3 * H])
        o = jax.nn.sigmoid(gates[:, 3 * H:4 * H])
        c = f * c + i * g
        h = o * jnp.tanh(c)
        return (h, c), None

    h0 = jnp.zeros((B, H), jnp.float32)
    c0 = jnp.zeros((B, H), jnp.float32)
    (hT, _), _ = lax.scan(step, (h0, c0), jnp.transpose(x, (1, 0, 2)))

    z = jnp.maximum(hT @ params["fc1_w"].T + params["fc1_b"], 0.0)
    eps = 1e-5
    z = (z - params["bn_mean"]) / jnp.sqrt(params["bn_var"] + eps) * params["bn_gamma"] + params["bn_beta"]
    return z @ params["fc2_w"].T + params["fc2_b"]


# -----------------------------------------------------------------------------
def init_params(key, input_size, hidden_size, num_classes):
    H, I, C = hidden_size, input_size, num_classes
    k_lstm = 1.0 / jnp.sqrt(H)
    keys = jax.random.split(key, 8)
    u = lambda k, shape, bound: jax.random.uniform(k, shape, jnp.float32, -bound, bound)
    return {
        "w_ih": u(keys[0], (4 * H, I), k_lstm),
        "w_hh": u(keys[1], (4 * H, H), k_lstm),
        "b_ih": u(keys[2], (4 * H,), k_lstm),
        "b_hh": u(keys[3], (4 * H,), k_lstm),
        "fc1_w": u(keys[4], (H, H), 1.0 / jnp.sqrt(H)),
        "fc1_b": u(keys[5], (H,), 1.0 / jnp.sqrt(H)),
        "fc2_w": u(keys[6], (C, H), 1.0 / jnp.sqrt(H)),
        "fc2_b": u(keys[7], (C,), 1.0 / jnp.sqrt(H)),
        "bn_gamma": jnp.ones((H,), jnp.float32),
        "bn_beta": jnp.zeros((H,), jnp.float32),
        "bn_mean": jnp.zeros((H,), jnp.float32),
        "bn_var": jnp.ones((H,), jnp.float32),
    }


if __name__ == "__main__":
    B, T, I, H, C = 2, 8, 8, 32, 4

    key = jax.random.PRNGKey(0)
    k_x, k_p = jax.random.split(key)
    x = jax.random.normal(k_x, (B, T, I), jnp.float32)
    params = init_params(k_p, I, H, C)

    logits = lstm_classifier_forward(x, params, num_classes=C)
    logits = jax.block_until_ready(logits)

    ref = reference_forward(x, params)
    assert logits.shape == (B, C)
    assert jnp.allclose(logits, ref, atol=1e-4, rtol=1e-4), (logits, ref)

    print("KERNEL_OK")
</pallas_src>

<mosaic_0001>
module attributes {stable_mosaic.version = 11 : i64} {
  func.func @_lstm_classifier_kernel(%arg0: memref<64x8xf32, #tpu.memory_space<vmem>>, %arg1: memref<200x128xf32, #tpu.memory_space<vmem>>, %arg2: memref<8x128xf32, #tpu.memory_space<vmem>>, %arg3: memref<8x128xf32, #tpu.memory_space<vmem>>) attributes {dimension_semantics = [], scalar_prefetch = 0 : i64, scratch_operands = 0 : i64, tpu.core_type = #tpu.core_type<tc>} {
    %c0 = arith.constant 0 : index
    %c0_0 = arith.constant 0 : index
    %0 = vector.load %arg1[%c0, %c0_0] : memref<200x128xf32, #tpu.memory_space<vmem>>, vector<8x128xf32>
    %c8 = arith.constant 8 : index
    %c0_1 = arith.constant 0 : index
    %1 = vector.load %arg1[%c8, %c0_1] : memref<200x128xf32, #tpu.memory_space<vmem>>, vector<32x128xf32>
    %c0_2 = arith.constant 0 : index
    %c0_3 = arith.constant 0 : index
    %2 = vector.load %arg2[%c0_2, %c0_3] : memref<8x128xf32, #tpu.memory_space<vmem>>, vector<8x128xf32>
    %3 = vector.extract_strided_slice %2 {offsets = [0, 0], sizes = [1, 128], strides = [1, 1]} : vector<8x128xf32> to vector<1x128xf32>
    %4 = vector.extract_strided_slice %2 {offsets = [1, 0], sizes = [1, 128], strides = [1, 1]} : vector<8x128xf32> to vector<1x128xf32>
    %5 = vector.extract_strided_slice %2 {offsets = [2, 0], sizes = [1, 128], strides = [1, 1]} : vector<8x128xf32> to vector<1x128xf32>
    %6 = vector.extract_strided_slice %2 {offsets = [3, 0], sizes = [1, 128], strides = [1, 1]} : vector<8x128xf32> to vector<1x128xf32>
    %7 = vector.extract_strided_slice %2 {offsets = [4, 0], sizes = [1, 128], strides = [1, 1]} : vector<8x128xf32> to vector<1x128xf32>
    %c0_4 = arith.constant 0 : index
    %c0_5 = arith.constant 0 : index
    %8 = vector.load %arg0[%c0_4, %c0_5] : memref<64x8xf32, #tpu.memory_space<vmem>>, vector<64x8xf32>
    %cst = arith.constant dense<0.000000e+00> : vector<64x128xf32>
    %9 = tpu.matmul %8, %0, %cst {dimension_numbers = #tpu.dot_dimension_numbers<[1], [0], [0], [1], [0, 0, 1, 1], [], []>} : vector<64x8xf32>, vector<8x128xf32>, vector<64x128xf32> -> vector<64x128xf32>
    %10 = vector.broadcast %3 : vector<1x128xf32> to vector<64x128xf32>
    %11 = arith.addf %9, %10 : vector<64x128xf32>
    %cst_6 = arith.constant 0.000000e+00 : f32
    %12 = vector.broadcast %cst_6 : f32 to vector<8x32xf32>
    %cst_7 = arith.constant 0.000000e+00 : f32
    %13 = vector.broadcast %cst_7 : f32 to vector<8x32xf32>
    %14 = vector.extract_strided_slice %11 {offsets = [0, 0], sizes = [8, 128], strides = [1, 1]} : vector<64x128xf32> to vector<8x128xf32>
    %cst_8 = arith.constant dense<0.000000e+00> : vector<8x128xf32>
    %15 = tpu.matmul %12, %1, %cst_8 {dimension_numbers = #tpu.dot_dimension_numbers<[1], [0], [0], [1], [0, 0, 1, 1], [], []>} : vector<8x32xf32>, vector<32x128xf32>, vector<8x128xf32> -> vector<8x128xf32>
    %16 = arith.addf %14, %15 : vector<8x128xf32>
    %17 = arith.negf %16 : vector<8x128xf32>
    %18 = math.exp %17 : vector<8x128xf32>
    %cst_9 = arith.constant 1.000000e+00 : f32
    %19 = vector.broadcast %cst_9 : f32 to vector<8x128xf32>
    %20 = arith.addf %19, %18 : vector<8x128xf32>
    %21 = arith.divf %19, %20 : vector<8x128xf32>
    %22 = vector.extract_strided_slice %21 {offsets = [0, 0], sizes = [8, 32], strides = [1, 1]} : vector<8x128xf32> to vector<8x32xf32>
    %23 = vector.extract_strided_slice %21 {offsets = [0, 32], sizes = [8, 32], strides = [1, 1]} : vector<8x128xf32> to vector<8x32xf32>
    %24 = vector.extract_strided_slice %21 {offsets = [0, 96], sizes = [8, 32], strides = [1, 1]} : vector<8x128xf32> to vector<8x32xf32>
    %25 = vector.extract_strided_slice %16 {offsets = [0, 64], sizes = [8, 32], strides = [1, 1]} : vector<8x128xf32> to vector<8x32xf32>
    %26 = math.tanh %25 : vector<8x32xf32>
    %27 = arith.mulf %23, %13 : vector<8x32xf32>
    %28 = arith.mulf %22, %26 : vector<8x32xf32>
    %29 = arith.addf %27, %28 : vector<8x32xf32>
    %30 = math.tanh %29 : vector<8x32xf32>
    %31 = arith.mulf %24, %30 : vector<8x32xf32>
    %32 = vector.extract_strided_slice %11 {offsets = [8, 0], sizes = [8, 128], strides = [1, 1]} : vector<64x128xf32> to vector<8x128xf32>
    %cst_10 = arith.constant dense<0.000000e+00> : vector<8x128xf32>
    %33 = tpu.matmul %31, %1, %cst_10 {dimension_numbers = #tpu.dot_dimension_numbers<[1], [0], [0], [1], [0, 0, 1, 1], [], []>} : vector<8x32xf32>, vector<32x128xf32>, vector<8x128xf32> -> vector<8x128xf32>
    %34 = arith.addf %32, %33 : vector<8x128xf32>
    %35 = arith.negf %34 : vector<8x128xf32>
    %36 = math.exp %35 : vector<8x128xf32>
    %cst_11 = arith.constant 1.000000e+00 : f32
    %37 = vector.broadcast %cst_11 : f32 to vector<8x128xf32>
    %38 = arith.addf %37, %36 : vector<8x128xf32>
    %39 = arith.divf %37, %38 : vector<8x128xf32>
    %40 = vector.extract_strided_slice %39 {offsets = [0, 0], sizes = [8, 32], strides = [1, 1]} : vector<8x128xf32> to vector<8x32xf32>
    %41 = vector.extract_strided_slice %39 {offsets = [0, 32], sizes = [8, 32], strides = [1, 1]} : vector<8x128xf32> to vector<8x32xf32>
    %42 = vector.extract_strided_slice %39 {offsets = [0, 96], sizes = [8, 32], strides = [1, 1]} : vector<8x128xf32> to vector<8x32xf32>
    %43 = vector.extract_strided_slice %34 {offsets = [0, 64], sizes = [8, 32], strides = [1, 1]} : vector<8x128xf32> to vector<8x32xf32>
    %44 = math.tanh %43 : vector<8x32xf32>
    %45 = arith.mulf %41, %29 : vector<8x32xf32>
    %46 = arith.mulf %40, %44 : vector<8x32xf32>
    %47 = arith.addf %45, %46 : vector<8x32xf32>
    %48 = math.tanh %47 : vector<8x32xf32>
    %49 = arith.mulf %42, %48 : vector<8x32xf32>
    %50 = vector.extract_strided_slice %11 {offsets = [16, 0], sizes = [8, 128], strides = [1, 1]} : vector<64x128xf32> to vector<8x128xf32>
    %cst_12 = arith.constant dense<0.000000e+00> : vector<8x128xf32>
    %51 = tpu.matmul %49, %1, %cst_12 {dimension_numbers = #tpu.dot_dimension_numbers<[1], [0], [0], [1], [0, 0, 1, 1], [], []>} : vector<8x32xf32>, vector<32x128xf32>, vector<8x128xf32> -> vector<8x128xf32>
    %52 = arith.addf %50, %51 : vector<8x128xf32>
    %53 = arith.negf %52 : vector<8x128xf32>
    %54 = math.exp %53 : vector<8x128xf32>
    %cst_13 = arith.constant 1.000000e+00 : f32
    %55 = vector.broadcast %cst_13 : f32 to vector<8x128xf32>
    %56 = arith.addf %55, %54 : vector<8x128xf32>
    %57 = arith.divf %55, %56 : vector<8x128xf32>
    %58 = vector.extract_strided_slice %57 {offsets = [0, 0], sizes = [8, 32], strides = [1, 1]} : vector<8x128xf32> to vector<8x32xf32>
    %59 = vector.extract_strided_slice %57 {offsets = [0, 32], sizes = [8, 32], strides = [1, 1]} : vector<8x128xf32> to vector<8x32xf32>
    %60 = vector.extract_strided_slice %57 {offsets = [0, 96], sizes = [8, 32], strides = [1, 1]} : vector<8x128xf32> to vector<8x32xf32>
    %61 = vector.extract_strided_slice %52 {offsets = [0, 64], sizes = [8, 32], strides = [1, 1]} : vector<8x128xf32> to vector<8x32xf32>
    %62 = math.tanh %61 : vector<8x32xf32>
    %63 = arith.mulf %59, %47 : vector<8x32xf32>
    %64 = arith.mulf %58, %62 : vector<8x32xf32>
    %65 = arith.addf %63, %64 : vector<8x32xf32>
    %66 = math.tanh %65 : vector<8x32xf32>
    %67 = arith.mulf %60, %66 : vector<8x32xf32>
    %68 = vector.extract_strided_slice %11 {offsets = [24, 0], sizes = [8, 128], strides = [1, 1]} : vector<64x128xf32> to vector<8x128xf32>
    %cst_14 = arith.constant dense<0.000000e+00> : vector<8x128xf32>
    %69 = tpu.matmul %67, %1, %cst_14 {dimension_numbers = #tpu.dot_dimension_numbers<[1], [0], [0], [1], [0, 0, 1, 1], [], []>} : vector<8x32xf32>, vector<32x128xf32>, vector<8x128xf32> -> vector<8x128xf32>
    %70 = arith.addf %68, %69 : vector<8x128xf32>
    %71 = arith.negf %70 : vector<8x128xf32>
    %72 = math.exp %71 : vector<8x128xf32>
    %cst_15 = arith.constant 1.000000e+00 : f32
    %73 = vector.broadcast %cst_15 : f32 to vector<8x128xf32>
    %74 = arith.addf %73, %72 : vector<8x128xf32>
    %75 = arith.divf %73, %74 : vector<8x128xf32>
    %76 = vector.extract_strided_slice %75 {offsets = [0, 0], sizes = [8, 32], strides = [1, 1]} : vector<8x128xf32> to vector<8x32xf32>
    %77 = vector.extract_strided_slice %75 {offsets = [0, 32], sizes = [8, 32], strides = [1, 1]} : vector<8x128xf32> to vector<8x32xf32>
    %78 = vector.extract_strided_slice %75 {offsets = [0, 96], sizes = [8, 32], strides = [1, 1]} : vector<8x128xf32> to vector<8x32xf32>
    %79 = vector.extract_strided_slice %70 {offsets = [0, 64], sizes = [8, 32], strides = [1, 1]} : vector<8x128xf32> to vector<8x32xf32>
    %80 = math.tanh %79 : vector<8x32xf32>
    %81 = arith.mulf %77, %65 : vector<8x32xf32>
    %82 = arith.mulf %76, %80 : vector<8x32xf32>
    %83 = arith.addf %81, %82 : vector<8x32xf32>
    %84 = math.tanh %83 : vector<8x32xf32>
    %85 = arith.mulf %78, %84 : vector<8x32xf32>
    %86 = vector.extract_strided_slice %11 {offsets = [32, 0], sizes = [8, 128], strides = [1, 1]} : vector<64x128xf32> to vector<8x128xf32>
    %cst_16 = arith.constant dense<0.000000e+00> : vector<8x128xf32>
    %87 = tpu.matmul %85, %1, %cst_16 {dimension_numbers = #tpu.dot_dimension_numbers<[1], [0], [0], [1], [0, 0, 1, 1], [], []>} : vector<8x32xf32>, vector<32x128xf32>, vector<8x128xf32> -> vector<8x128xf32>
    %88 = arith.addf %86, %87 : vector<8x128xf32>
    %89 = arith.negf %88 : vector<8x128xf32>
    %90 = math.exp %89 : vector<8x128xf32>
    %cst_17 = arith.constant 1.000000e+00 : f32
    %91 = vector.broadcast %cst_17 : f32 to vector<8x128xf32>
    %92 = arith.addf %91, %90 : vector<8x128xf32>
    %93 = arith.divf %91, %92 : vector<8x128xf32>
    %94 = vector.extract_strided_slice %93 {offsets = [0, 0], sizes = [8, 32], strides = [1, 1]} : vector<8x128xf32> to vector<8x32xf32>
    %95 = vector.extract_strided_slice %93 {offsets = [0, 32], sizes = [8, 32], strides = [1, 1]} : vector<8x128xf32> to vector<8x32xf32>
    %96 = vector.extract_strided_slice %93 {offsets = [0, 96], sizes = [8, 32], strides = [1, 1]} : vector<8x128xf32> to vector<8x32xf32>
    %97 = vector.extract_strided_slice %88 {offsets = [0, 64], sizes = [8, 32], strides = [1, 1]} : vector<8x128xf32> to vector<8x32xf32>
    %98 = math.tanh %97 : vector<8x32xf32>
    %99 = arith.mulf %95, %83 : vector<8x32xf32>
    %100 = arith.mulf %94, %98 : vector<8x32xf32>
    %101 = arith.addf %99, %100 : vector<8x32xf32>
    %102 = math.tanh %101 : vector<8x32xf32>
    %103 = arith.mulf %96, %102 : vector<8x32xf32>
    %104 = vector.extract_strided_slice %11 {offsets = [40, 0], sizes = [8, 128], strides = [1, 1]} : vector<64x128xf32> to vector<8x128xf32>
    %cst_18 = arith.constant dense<0.000000e+00> : vector<8x128xf32>
    %105 = tpu.matmul %103, %1, %cst_18 {dimension_numbers = #tpu.dot_dimension_numbers<[1], [0], [0], [1], [0, 0, 1, 1], [], []>} : vector<8x32xf32>, vector<32x128xf32>, vector<8x128xf32> -> vector<8x128xf32>
    %106 = arith.addf %104, %105 : vector<8x128xf32>
    %107 = arith.negf %106 : vector<8x128xf32>
    %108 = math.exp %107 : vector<8x128xf32>
    %cst_19 = arith.constant 1.000000e+00 : f32
    %109 = vector.broadcast %cst_19 : f32 to vector<8x128xf32>
    %110 = arith.addf %109, %108 : vector<8x128xf32>
    %111 = arith.divf %109, %110 : vector<8x128xf32>
    %112 = vector.extract_strided_slice %111 {offsets = [0, 0], sizes = [8, 32], strides = [1, 1]} : vector<8x128xf32> to vector<8x32xf32>
    %113 = vector.extract_strided_slice %111 {offsets = [0, 32], sizes = [8, 32], strides = [1, 1]} : vector<8x128xf32> to vector<8x32xf32>
    %114 = vector.extract_strided_slice %111 {offsets = [0, 96], sizes = [8, 32], strides = [1, 1]} : vector<8x128xf32> to vector<8x32xf32>
    %115 = vector.extract_strided_slice %106 {offsets = [0, 64], sizes = [8, 32], strides = [1, 1]} : vector<8x128xf32> to vector<8x32xf32>
    %116 = math.tanh %115 : vector<8x32xf32>
    %117 = arith.mulf %113, %101 : vector<8x32xf32>
    %118 = arith.mulf %112, %116 : vector<8x32xf32>
    %119 = arith.addf %117, %118 : vector<8x32xf32>
    %120 = math.tanh %119 : vector<8x32xf32>
    %121 = arith.mulf %114, %120 : vector<8x32xf32>
    %122 = vector.extract_strided_slice %11 {offsets = [48, 0], sizes = [8, 128], strides = [1, 1]} : vector<64x128xf32> to vector<8x128xf32>
    %cst_20 = arith.constant dense<0.000000e+00> : vector<8x128xf32>
    %123 = tpu.matmul %121, %1, %cst_20 {dimension_numbers = #tpu.dot_dimension_numbers<[1], [0], [0], [1], [0, 0, 1, 1], [], []>} : vector<8x32xf32>, vector<32x128xf32>, vector<8x128xf32> -> vector<8x128xf32>
    %124 = arith.addf %122, %123 : vector<8x128xf32>
    %125 = arith.negf %124 : vector<8x128xf32>
    %126 = math.exp %125 : vector<8x128xf32>
    %cst_21 = arith.constant 1.000000e+00 : f32
    %127 = vector.broadcast %cst_21 : f32 to vector<8x128xf32>
    %128 = arith.addf %127, %126 : vector<8x128xf32>
    %129 = arith.divf %127, %128 : vector<8x128xf32>
    %130 = vector.extract_strided_slice %129 {offsets = [0, 0], sizes = [8, 32], strides = [1, 1]} : vector<8x128xf32> to vector<8x32xf32>
    %131 = vector.extract_strided_slice %129 {offsets = [0, 32], sizes = [8, 32], strides = [1, 1]} : vector<8x128xf32> to vector<8x32xf32>
    %132 = vector.extract_strided_slice %129 {offsets = [0, 96], sizes = [8, 32], strides = [1, 1]} : vector<8x128xf32> to vector<8x32xf32>
    %133 = vector.extract_strided_slice %124 {offsets = [0, 64], sizes = [8, 32], strides = [1, 1]} : vector<8x128xf32> to vector<8x32xf32>
    %134 = math.tanh %133 : vector<8x32xf32>
    %135 = arith.mulf %131, %119 : vector<8x32xf32>
    %136 = arith.mulf %130, %134 : vector<8x32xf32>
    %137 = arith.addf %135, %136 : vector<8x32xf32>
    %138 = math.tanh %137 : vector<8x32xf32>
    %139 = arith.mulf %132, %138 : vector<8x32xf32>
    %140 = vector.extract_strided_slice %11 {offsets = [56, 0], sizes = [8, 128], strides = [1, 1]} : vector<64x128xf32> to vector<8x128xf32>
    %cst_22 = arith.constant dense<0.000000e+00> : vector<8x128xf32>
    %141 = tpu.matmul %139, %1, %cst_22 {dimension_numbers = #tpu.dot_dimension_numbers<[1], [0], [0], [1], [0, 0, 1, 1], [], []>} : vector<8x32xf32>, vector<32x128xf32>, vector<8x128xf32> -> vector<8x128xf32>
    %142 = arith.addf %140, %141 : vector<8x128xf32>
    %143 = arith.negf %142 : vector<8x128xf32>
    %144 = math.exp %143 : vector<8x128xf32>
    %cst_23 = arith.constant 1.000000e+00 : f32
    %145 = vector.broadcast %cst_23 : f32 to vector<8x128xf32>
    %146 = arith.addf %145, %144 : vector<8x128xf32>
    %147 = arith.divf %145, %146 : vector<8x128xf32>
    %148 = vector.extract_strided_slice %147 {offsets = [0, 0], sizes = [8, 32], strides = [1, 1]} : vector<8x128xf32> to vector<8x32xf32>
    %149 = vector.extract_strided_slice %147 {offsets = [0, 32], sizes = [8, 32], strides = [1, 1]} : vector<8x128xf32> to vector<8x32xf32>
    %150 = vector.extract_strided_slice %147 {offsets = [0, 96], sizes = [8, 32], strides = [1, 1]} : vector<8x128xf32> to vector<8x32xf32>
    %151 = vector.extract_strided_slice %142 {offsets = [0, 64], sizes = [8, 32], strides = [1, 1]} : vector<8x128xf32> to vector<8x32xf32>
    %152 = math.tanh %151 : vector<8x32xf32>
    %153 = arith.mulf %149, %137 : vector<8x32xf32>
    %154 = arith.mulf %148, %152 : vector<8x32xf32>
    %155 = arith.addf %153, %154 : vector<8x32xf32>
    %156 = math.tanh %155 : vector<8x32xf32>
    %157 = arith.mulf %150, %156 : vector<8x32xf32>
    %c40 = arith.constant 40 : index
    %c0_24 = arith.constant 0 : index
    %158 = vector.load %arg1[%c40, %c0_24] : memref<200x128xf32, #tpu.memory_space<vmem>>, vector<32x128xf32>
    %c72 = arith.constant 72 : index
    %c0_25 = arith.constant 0 : index
    %159 = vector.load %arg1[%c72, %c0_25] : memref<200x128xf32, #tpu.memory_space<vmem>>, vector<128x128xf32>
    %cst_26 = arith.constant dense<0.000000e+00> : vector<8x128xf32>
    %160 = tpu.matmul %157, %158, %cst_26 {dimension_numbers = #tpu.dot_dimension_numbers<[1], [0], [0], [1], [0, 0, 1, 1], [], []>} : vector<8x32xf32>, vector<32x128xf32>, vector<8x128xf32> -> vector<8x128xf32>
    %161 = vector.broadcast %4 : vector<1x128xf32> to vector<8x128xf32>
    %162 = arith.addf %160, %161 : vector<8x128xf32>
    %cst_27 = arith.constant 0.000000e+00 : f32
    %163 = vector.broadcast %cst_27 : f32 to vector<8x128xf32>
    %164 = arith.maximumf %162, %163 : vector<8x128xf32>
    %165 = vector.broadcast %5 : vector<1x128xf32> to vector<8x128xf32>
    %166 = arith.mulf %164, %165 : vector<8x128xf32>
    %167 = vector.broadcast %6 : vector<1x128xf32> to vector<8x128xf32>
    %168 = arith.addf %166, %167 : vector<8x128xf32>
    %cst_28 = arith.constant dense<0.000000e+00> : vector<8x128xf32>
    %169 = tpu.matmul %168, %159, %cst_28 {dimension_numbers = #tpu.dot_dimension_numbers<[1], [0], [0], [1], [0, 0, 1, 1], [], []>} : vector<8x128xf32>, vector<128x128xf32>, vector<8x128xf32> -> vector<8x128xf32>
    %170 = vector.broadcast %7 : vector<1x128xf32> to vector<8x128xf32>
    %171 = arith.addf %169, %170 : vector<8x128xf32>
    %c0_29 = arith.constant 0 : index
    %c0_30 = arith.constant 0 : index
    %172 = vector.load %arg3[%c0_29, %c0_30] : memref<8x128xf32, #tpu.memory_space<vmem>>, vector<8x128xf32>
    tpu.vector_store %arg3[%c0_29, %c0_30], %171 {strides = array<i32>} : memref<8x128xf32, #tpu.memory_space<vmem>>, vector<8x128xf32>,
    return
  }
}

</mosaic_0001>

<llo_original>
// kernel: lstm_classifier_forward.1
$region0: #{lstm_classifier_forward.1}
  #allocation0 [shape = 'u32[]', space=smem, size = 0x4, offset = 0x4, fixed_abs, tag = 'smem constant byte address 0x4 - core index']
  #allocation1 [shape = 'u32[144,128]{1,0:T(1,128)}', space=vmem, size = 0x12000, scoped, tag = 'internal scratch']
  %s0 = inlined_call_operand.vmem [shape: f32[64,8], index: 0, kind: input, shape index: {}]
  %s1 = inlined_call_operand.vmem [shape: f32[200,128], index: 1, kind: input, shape index: {}]
  %s2 = inlined_call_operand.vmem [shape: f32[8,128], index: 2, kind: input, shape index: {}]
  %s3 = inlined_call_operand.vmem [shape: f32[8,128], index: 3, kind: output, shape index: {}]
  %s4 = sld [smem:[#allocation0]]
  $region22: #{lstm_classifier_forward.1} parent=0
    _
  %s6 = ssub.s32 1, %s4
  %s7 = scalar_select 0, %s6, %s4
  // Predicated region
  $region2: #{lstm_classifier_forward.1} parent=0 // pred_check
    _
  $region3: #{lstm_classifier_forward.1} parent=0 // pred_check_branch
    %9 = sbr.rel (0) target = $region5
  $region4: #{lstm_classifier_forward.1} parent=0 // pred_region
    _
  $region5: #{lstm_classifier_forward.1} parent=0 // pred_fallthru
    _
  // Predicated region
  $region6: #{lstm_classifier_forward.1} parent=0 // pred_check
    _
  $region7: #{lstm_classifier_forward.1} parent=0 // pred_check_branch
    %11 = sbr.rel (0) target = $region9
  $region8: #{lstm_classifier_forward.1} parent=0 // pred_region
    _
  $region9: #{lstm_classifier_forward.1} parent=0 // pred_fallthru
    _
  // Predicated region
  $region10: #{lstm_classifier_forward.1} parent=0 // pred_check
    _
  $region11: #{lstm_classifier_forward.1} parent=0 // pred_check_branch
    %13 = sbr.rel (0) target = $region13
  $region12: #{lstm_classifier_forward.1} parent=0 // pred_region
    _
  $region13: #{lstm_classifier_forward.1} parent=0 // pred_fallthru
    _
  %v14 = vld [vmem:[%s1] sm:$0xff]
  %v15 = vld [vmem:[%s1 + $0x8] sm:$0xff]
  %v16 = vld [vmem:[%s1 + $0x10] sm:$0xff]
  %v17 = vld [vmem:[%s1 + $0x18] sm:$0xff]
  %v18 = vld [vmem:[%s1 + $0x20] sm:$0xff]
  %v19 = vld [vmem:[%s2] sm:$0xff]
  %v20 = vld [vmem:[%s0] sm:$0xff]
  %v21 = vld [vmem:[%s0 + $0x8] sm:$0xff]
  %v22 = vld [vmem:[%s0 + $0x10] sm:$0xff]
  %v23 = vld [vmem:[%s0 + $0x18] sm:$0xff]
  %v24 = vld [vmem:[%s0 + $0x20] sm:$0xff]
  %v25 = vld [vmem:[%s0 + $0x28] sm:$0xff]
  %v26 = vld [vmem:[%s0 + $0x30] sm:$0xff]
  %v27 = vld [vmem:[%s0 + $0x38] sm:$0xff]
  %v28 = vlaneseq
  %v29 = vshrl.u32 %v28, 7
  %v30 = vsub.s32 0, %v29
  %v31 = vrot.slane %v19, %v30
  %vm32 = vcmask 64512
  %v34 = vsel %vm32, %v20, 0
  %v37 = vsel %vm32, %v21, 0
  %v40 = vsel %vm32, %v22, 0
  %v43 = vsel %vm32, %v23, 0
  %v46 = vsel %vm32, %v24, 0
  %v49 = vsel %vm32, %v25, 0
  %v52 = vsel %vm32, %v26, 0
  %v55 = vsel %vm32, %v27, 0
  %57 = vmatprep.subr.mxu0 0.0
  %58 = vmatpush1.msra.mxu0 0.0
  %59 = vmatprep.subr.mxu0 0.0
  %60 = vmatpush1.msra.mxu0 0.0
  %61 = vmatprep.subr.mxu0 0.0
  %62 = vmatpush1.msra.mxu0 0.0
  %63 = vmatprep.subr.mxu0 0.0
  %64 = vmatpush1.msra.mxu0 0.0
  %65 = vmatprep.subr.mxu0 0.0
  %66 = vmatpush1.msra.mxu0 0.0
  %67 = vmatprep.subr.mxu0 0.0
  %68 = vmatpush1.msra.mxu0 0.0
  %69 = vmatprep.subr.mxu0 0.0
  %70 = vmatpush1.msra.mxu0 0.0
  %71 = vmatprep.subr.mxu0 0.0
  %72 = vmatpush1.msra.mxu0 0.0
  %73 = vmatprep.subr.mxu0 0.0
  %74 = vmatpush1.msra.mxu0 0.0
  %75 = vmatprep.subr.mxu0 0.0
  %76 = vmatpush1.msra.mxu0 0.0
  %77 = vmatprep.subr.mxu0 0.0
  %78 = vmatpush1.msra.mxu0 0.0
  %79 = vmatprep.subr.mxu0 0.0
  %80 = vmatpush1.msra.mxu0 0.0
  %81 = vmatprep.subr.mxu0 0.0
  %82 = vmatpush1.msra.mxu0 0.0
  %83 = vmatprep.subr.mxu0 0.0
  %84 = vmatpush1.msra.mxu0 0.0
  %85 = vmatprep.subr.mxu0 0.0
  %86 = vmatpush1.msra.mxu0 0.0
  %87 = vmatprep.subr.mxu0 0.0
  %88 = vmatpush1.msra.mxu0 %v14
  %89 = vmatprep.subr.mxu0 0.0
  %90 = vmatpush2.msra.mxu0 0.0
  %91 = vmatprep.subr.mxu0 0.0
  %92 = vmatpush2.msra.mxu0 0.0
  %93 = vmatprep.subr.mxu0 0.0
  %94 = vmatpush2.msra.mxu0 0.0
  %95 = vmatprep.subr.mxu0 0.0
  %96 = vmatpush2.msra.mxu0 0.0
  %97 = vmatprep.subr.mxu0 0.0
  %98 = vmatpush2.msra.mxu0 0.0
  %99 = vmatprep.subr.mxu0 0.0
  %100 = vmatpush2.msra.mxu0 0.0
  %101 = vmatprep.subr.mxu0 0.0
  %102 = vmatpush2.msra.mxu0 0.0
  %103 = vmatprep.subr.mxu0 0.0
  %104 = vmatpush2.msra.mxu0 0.0
  %105 = vmatprep.subr.mxu0 0.0
  %106 = vmatpush2.msra.mxu0 0.0
  %107 = vmatprep.subr.mxu0 0.0
  %108 = vmatpush2.msra.mxu0 0.0
  %109 = vmatprep.subr.mxu0 0.0
  %110 = vmatpush2.msra.mxu0 0.0
  %111 = vmatprep.subr.mxu0 0.0
  %112 = vmatpush2.msra.mxu0 0.0
  %113 = vmatprep.subr.mxu0 0.0
  %114 = vmatpush2.msra.mxu0 0.0
  %115 = vmatprep.subr.mxu0 0.0
  %116 = vmatpush2.msra.mxu0 0.0
  %117 = vmatprep.subr.mxu0 0.0
  %118 = vmatpush2.msra.mxu0 0.0
  %119 = vmatprep.subr.mxu0 0.0
  %120 = vmatpush2.msra.mxu0 0.0
  %121 = vmatprep.mubr.f32.mxu0 0.0
  %122 = vmatmul.mubr.f32.gmra.mxu0 %v34
  %v123 = vpop.f32.mrf.mxu0
  %v124 = vadd.f32 %v31, %v123
  %v125 = vpop.f32.mrf.mxu0
  %126 = vmatprep.mubr.f32.mxu0 0.0
  %127 = vmatmul.mubr.f32.gmra.mxu0 %v37
  %v128 = vpop.f32.mrf.mxu0
  %v129 = vadd.f32 %v31, %v128
  %v130 = vpop.f32.mrf.mxu0
  %131 = vmatprep.mubr.f32.mxu0 0.0
  %132 = vmatmul.mubr.f32.gmra.mxu0 %v40
  %v133 = vpop.f32.mrf.mxu0
  %v134 = vadd.f32 %v31, %v133
  %v135 = vpop.f32.mrf.mxu0
  %136 = vmatprep.mubr.f32.mxu0 0.0
  %137 = vmatmul.mubr.f32.gmra.mxu0 %v43
  %v138 = vpop.f32.mrf.mxu0
  %v139 = vadd.f32 %v31, %v138
  %v140 = vpop.f32.mrf.mxu0
  %141 = vmatprep.mubr.f32.mxu0 0.0
  %142 = vmatmul.mubr.f32.gmra.mxu0 %v46
  %v143 = vpop.f32.mrf.mxu0
  %v144 = vadd.f32 %v31, %v143
  %v145 = vpop.f32.mrf.mxu0
  %146 = vmatprep.mubr.f32.mxu0 0.0
  %147 = vmatmul.mubr.f32.gmra.mxu0 %v49
  %v148 = vpop.f32.mrf.mxu0
  %v149 = vadd.f32 %v31, %v148
  %v150 = vpop.f32.mrf.mxu0
  %151 = vmatprep.mubr.f32.mxu0 0.0
  %152 = vmatmul.mubr.f32.gmra.mxu0 %v52
  %v153 = vpop.f32.mrf.mxu0
  %v154 = vadd.f32 %v31, %v153
  %v155 = vpop.f32.mrf.mxu0
  %156 = vmatprep.mubr.f32.mxu0 0.0
  %157 = vmatmul.mubr.f32.gmra.mxu0 %v55
  %v158 = vpop.f32.mrf.mxu0
  %v159 = vadd.f32 %v31, %v158
  %v160 = vpop.f32.mrf.mxu0
  %161 = vdwg.mxu0
  %vm162 = vcmask 261120
  %v164 = vsel %vm162, 0.0, 0
  %166 = vmatprep.subr.mxu0 0.0
  %167 = vmatpush1.msra.mxu0 0.0
  %168 = vmatprep.subr.mxu0 0.0
  %169 = vmatpush1.msra.mxu0 0.0
  %170 = vmatprep.subr.mxu0 0.0
  %171 = vmatpush1.msra.mxu0 0.0
  %172 = vmatprep.subr.mxu0 0.0
  %173 = vmatpush1.msra.mxu0 0.0
  %174 = vmatprep.subr.mxu0 0.0
  %175 = vmatpush1.msra.mxu0 0.0
  %176 = vmatprep.subr.mxu0 0.0
  %177 = vmatpush1.msra.mxu0 0.0
  %178 = vmatprep.subr.mxu0 0.0
  %179 = vmatpush1.msra.mxu0 0.0
  %180 = vmatprep.subr.mxu0 0.0
  %181 = vmatpush1.msra.mxu0 0.0
  %182 = vmatprep.subr.mxu0 0.0
  %183 = vmatpush1.msra.mxu0 0.0
  %184 = vmatprep.subr.mxu0 0.0
  %185 = vmatpush1.msra.mxu0 0.0
  %186 = vmatprep.subr.mxu0 0.0
  %187 = vmatpush1.msra.mxu0 0.0
  %188 = vmatprep.subr.mxu0 0.0
  %189 = vmatpush1.msra.mxu0 0.0
  %190 = vmatprep.subr.mxu0 0.0
  %191 = vmatpush1.msra.mxu0 %v18
  %192 = vmatprep.subr.mxu0 0.0
  %193 = vmatpush1.msra.mxu0 %v17
  %194 = vmatprep.subr.mxu0 0.0
  %195 = vmatpush1.msra.mxu0 %v16
  %196 = vmatprep.subr.mxu0 0.0
  %197 = vmatpush1.msra.mxu0 %v15
  %198 = vmatprep.subr.mxu0 0.0
  %199 = vmatpush2.msra.mxu0 0.0
  %200 = vmatprep.subr.mxu0 0.0
  %201 = vmatpush2.msra.mxu0 0.0
  %202 = vmatprep.subr.mxu0 0.0
  %203 = vmatpush2.msra.mxu0 0.0
  %204 = vmatprep.subr.mxu0 0.0
  %205 = vmatpush2.msra.mxu0 0.0
  %206 = vmatprep.subr.mxu0 0.0
  %207 = vmatpush2.msra.mxu0 0.0
  %208 = vmatprep.subr.mxu0 0.0
  %209 = vmatpush2.msra.mxu0 0.0
  %210 = vmatprep.subr.mxu0 0.0
  %211 = vmatpush2.msra.mxu0 0.0
  %212 = vmatprep.subr.mxu0 0.0
  %213 = vmatpush2.msra.mxu0 0.0
  %214 = vmatprep.subr.mxu0 0.0
  %215 = vmatpush2.msra.mxu0 0.0
  %216 = vmatprep.subr.mxu0 0.0
  %217 = vmatpush2.msra.mxu0 0.0
  %218 = vmatprep.subr.mxu0 0.0
  %219 = vmatpush2.msra.mxu0 0.0
  %220 = vmatprep.subr.mxu0 0.0
  %221 = vmatpush2.msra.mxu0 0.0
  %222 = vmatprep.subr.mxu0 0.0
  %223 = vmatpush2.msra.mxu0 0.0
  %224 = vmatprep.subr.mxu0 0.0
  %225 = vmatpush2.msra.mxu0 0.0
  %226 = vmatprep.subr.mxu0 0.0
  %227 = vmatpush2.msra.mxu0 0.0
  %228 = vmatprep.subr.mxu0 0.0
  %229 = vmatpush2.msra.mxu0 0.0
  %230 = vmatprep.mubr.f32.mxu0 0.0
  %231 = vmatmul.mubr.f32.gmra.mxu0 %v164
  %v232 = vpop.f32.mrf.mxu0
  %v233 = vadd.f32 0.0, %v232
  %v234 = vpop.f32.mrf.mxu0
  %235 = vdwg.mxu0
  %v236 = vadd.f32 %v124, %v233
  %v237 = vxor.u32 %v236, 2147483648
  %v238 = vmul.f32 %v237, 1.442695
  %v239 = vpow.pop %v238
  %v240 = vadd.f32 %v239, 1.0
  %v241 = vrcp.pop %v240
  %v242 = vmul.f32 1.0, %v241
  %v243 = vtanh.pop %v236
  %v244 = vmul.f32 %v242, 0.0
  %246 = vrot.lane.b32.xlu0 %v243, 64
  %v247 = vpop.permute.xlu0 %246
  %v249 = vmul.f32 %v242, %v247
  %251 = vrot.lane.b32.xlu0 %v249, 32
  %v252 = vpop.permute.xlu0 %251
  %v254 = vadd.f32 %v244, %v252
  %v255 = vtanh.pop %v254
  %257 = vrot.lane.b32.xlu0 %v255, 64
  %v258 = vpop.permute.xlu0 %257
  %v260 = vmul.f32 %v242, %v258
  %262 = vrot.lane.b32.xlu0 %v260, 32
  %v263 = vpop.permute.xlu0 %262
  %v264 = vsel %vm162, %v263, 0
  %266 = vmatprep.subr.mxu0 0.0
  %267 = vmatpush1.msra.mxu0 0.0
  %268 = vmatprep.subr.mxu0 0.0
  %269 = vmatpush1.msra.mxu0 0.0
  %270 = vmatprep.subr.mxu0 0.0
  %271 = vmatpush1.msra.mxu0 0.0
  %272 = vmatprep.subr.mxu0 0.0
  %273 = vmatpush1.msra.mxu0 0.0
  %274 = vmatprep.subr.mxu0 0.0
  %275 = vmatpush1.msra.mxu0 0.0
  %276 = vmatprep.subr.mxu0 0.0
  %277 = vmatpush1.msra.mxu0 0.0
  %278 = vmatprep.subr.mxu0 0.0
  %279 = vmatpush1.msra.mxu0 0.0
  %280 = vmatprep.subr.mxu0 0.0
  %281 = vmatpush1.msra.mxu0 0.0
  %282 = vmatprep.subr.mxu0 0.0
  %283 = vmatpush1.msra.mxu0 0.0
  %284 = vmatprep.subr.mxu0 0.0
  %285 = vmatpush1.msra.mxu0 0.0
  %286 = vmatprep.subr.mxu0 0.0
  %287 = vmatpush1.msra.mxu0 0.0
  %288 = vmatprep.subr.mxu0 0.0
  %289 = vmatpush1.msra.mxu0 0.0
  %290 = vmatprep.subr.mxu0 0.0
  %291 = vmatpush1.msra.mxu0 %v18
  %292 = vmatprep.subr.mxu0 0.0
  %293 = vmatpush1.msra.mxu0 %v17
  %294 = vmatprep.subr.mxu0 0.0
  %295 = vmatpush1.msra.mxu0 %v16
  %296 = vmatprep.subr.mxu0 0.0
  %297 = vmatpush1.msra.mxu0 %v15
  %298 = vmatprep.subr.mxu0 0.0
  %299 = vmatpush2.msra.mxu0 0.0
  %300 = vmatprep.subr.mxu0 0.0
  %301 = vmatpush2.msra.mxu0 0.0
  %302 = vmatprep.subr.mxu0 0.0
  %303 = vmatpush2.msra.mxu0 0.0
  %304 = vmatprep.subr.mxu0 0.0
  %305 = vmatpush2.msra.mxu0 0.0
  %306 = vmatprep.subr.mxu0 0.0
  %307 = vmatpush2.msra.mxu0 0.0
  %308 = vmatprep.subr.mxu0 0.0
  %309 = vmatpush2.msra.mxu0 0.0
  %310 = vmatprep.subr.mxu0 0.0
  %311 = vmatpush2.msra.mxu0 0.0
  %312 = vmatprep.subr.mxu0 0.0
  %313 = vmatpush2.msra.mxu0 0.0
  %314 = vmatprep.subr.mxu0 0.0
  %315 = vmatpush2.msra.mxu0 0.0
  %316 = vmatprep.subr.mxu0 0.0
  %317 = vmatpush2.msra.mxu0 0.0
  %318 = vmatprep.subr.mxu0 0.0
  %319 = vmatpush2.msra.mxu0 0.0
  %320 = vmatprep.subr.mxu0 0.0
  %321 = vmatpush2.msra.mxu0 0.0
  %322 = vmatprep.subr.mxu0 0.0
  %323 = vmatpush2.msra.mxu0 0.0
  %324 = vmatprep.subr.mxu0 0.0
  %325 = vmatpush2.msra.mxu0 0.0
  %326 = vmatprep.subr.mxu0 0.0
  %327 = vmatpush2.msra.mxu0 0.0
  %328 = vmatprep.subr.mxu0 0.0
  %329 = vmatpush2.msra.mxu0 0.0
  %330 = vmatprep.mubr.f32.mxu0 0.0
  %331 = vmatmul.mubr.f32.gmra.mxu0 %v264
  %v332 = vpop.f32.mrf.mxu0
  %v333 = vadd.f32 0.0, %v332
  %v334 = vpop.f32.mrf.mxu0
  %335 = vdwg.mxu0
  %v336 = vadd.f32 %v129, %v333
  %v337 = vxor.u32 %v336, 2147483648
  %v338 = vmul.f32 %v337, 1.442695
  %v339 = vpow.pop %v338
  %v340 = vadd.f32 %v339, 1.0
  %v341 = vrcp.pop %v340
  %v342 = vmul.f32 1.0, %v341
  %v343 = vtanh.pop %v336
  %v344 = vmul.f32 %v342, %v254
  %346 = vrot.lane.b32.xlu0 %v343, 64
  %v347 = vpop.permute.xlu0 %346
  %v349 = vmul.f32 %v342, %v347
  %351 = vrot.lane.b32.xlu0 %v349, 32
  %v352 = vpop.permute.xlu0 %351
  %v354 = vadd.f32 %v344, %v352
  %v355 = vtanh.pop %v354
  %357 = vrot.lane.b32.xlu0 %v355, 64
  %v358 = vpop.permute.xlu0 %357
  %v360 = vmul.f32 %v342, %v358
  %362 = vrot.lane.b32.xlu0 %v360, 32
  %v363 = vpop.permute.xlu0 %362
  %v364 = vsel %vm162, %v363, 0
  %366 = vmatprep.subr.mxu0 0.0
  %367 = vmatpush1.msra.mxu0 0.0
  %368 = vmatprep.subr.mxu0 0.0
  %369 = vmatpush1.msra.mxu0 0.0
  %370 = vmatprep.subr.mxu0 0.0
  %371 = vmatpush1.msra.mxu0 0.0
  %372 = vmatprep.subr.mxu0 0.0
  %373 = vmatpush1.msra.mxu0 0.0
  %374 = vmatprep.subr.mxu0 0.0
  %375 = vmatpush1.msra.mxu0 0.0
  %376 = vmatprep.subr.mxu0 0.0
  %377 = vmatpush1.msra.mxu0 0.0
  %378 = vmatprep.subr.mxu0 0.0
  %379 = vmatpush1.msra.mxu0 0.0
  %380 = vmatprep.subr.mxu0 0.0
  %381 = vmatpush1.msra.mxu0 0.0
  %382 = vmatprep.subr.mxu0 0.0
  %383 = vmatpush1.msra.mxu0 0.0
  %384 = vmatprep.subr.mxu0 0.0
  %385 = vmatpush1.msra.mxu0 0.0
  %386 = vmatprep.subr.mxu0 0.0
  %387 = vmatpush1.msra.mxu0 0.0
  %388 = vmatprep.subr.mxu0 0.0
  %389 = vmatpush1.msra.mxu0 0.0
  %390 = vmatprep.subr.mxu0 0.0
  %391 = vmatpush1.msra.mxu0 %v18
  %392 = vmatprep.subr.mxu0 0.0
  %393 = vmatpush1.msra.mxu0 %v17
  %394 = vmatprep.subr.mxu0 0.0
  %395 = vmatpush1.msra.mxu0 %v16
  %396 = vmatprep.subr.mxu0 0.0
  %397 = vmatpush1.msra.mxu0 %v15
  %398 = vmatprep.subr.mxu0 0.0
  %399 = vmatpush2.msra.mxu0 0.0
  %400 = vmatprep.subr.mxu0 0.0
  %401 = vmatpush2.msra.mxu0 0.0
  %402 = vmatprep.subr.mxu0 0.0
  %403 = vmatpush2.msra.mxu0 0.0
  %404 = vmatprep.subr.mxu0 0.0
  %405 = vmatpush2.msra.mxu0 0.0
  %406 = vmatprep.subr.mxu0 0.0
  %407 = vmatpush2.msra.mxu0 0.0
  %408 = vmatprep.subr.mxu0 0.0
  %409 = vmatpush2.msra.mxu0 0.0
  %410 = vmatprep.subr.mxu0 0.0
  %411 = vmatpush2.msra.mxu0 0.0
  %412 = vmatprep.subr.mxu0 0.0
  %413 = vmatpush2.msra.mxu0 0.0
  %414 = vmatprep.subr.mxu0 0.0
  %415 = vmatpush2.msra.mxu0 0.0
  %416 = vmatprep.subr.mxu0 0.0
  %417 = vmatpush2.msra.mxu0 0.0
  %418 = vmatprep.subr.mxu0 0.0
  %419 = vmatpush2.msra.mxu0 0.0
  %420 = vmatprep.subr.mxu0 0.0
  %421 = vmatpush2.msra.mxu0 0.0
  %422 = vmatprep.subr.mxu0 0.0
  %423 = vmatpush2.msra.mxu0 0.0
  %424 = vmatprep.subr.mxu0 0.0
  %425 = vmatpush2.msra.mxu0 0.0
  %426 = vmatprep.subr.mxu0 0.0
  %427 = vmatpush2.msra.mxu0 0.0
  %428 = vmatprep.subr.mxu0 0.0
  %429 = vmatpush2.msra.mxu0 0.0
  %430 = vmatprep.mubr.f32.mxu0 0.0
  %431 = vmatmul.mubr.f32.gmra.mxu0 %v364
  %v432 = vpop.f32.mrf.mxu0
  %v433 = vadd.f32 0.0, %v432
  %v434 = vpop.f32.mrf.mxu0
  %435 = vdwg.mxu0
  %v436 = vadd.f32 %v134, %v433
  %v437 = vxor.u32 %v436, 2147483648
  %v438 = vmul.f32 %v437, 1.442695
  %v439 = vpow.pop %v438
  %v440 = vadd.f32 %v439, 1.0
  %v441 = vrcp.pop %v440
  %v442 = vmul.f32 1.0, %v441
  %v443 = vtanh.pop %v436
  %v444 = vmul.f32 %v442, %v354
  %446 = vrot.lane.b32.xlu0 %v443, 64
  %v447 = vpop.permute.xlu0 %446
  %v449 = vmul.f32 %v442, %v447
  %451 = vrot.lane.b32.xlu0 %v449, 32
  %v452 = vpop.permute.xlu0 %451
  %v454 = vadd.f32 %v444, %v452
  %v455 = vtanh.pop %v454
  %457 = vrot.lane.b32.xlu0 %v455, 64
  %v458 = vpop.permute.xlu0 %457
  %v460 = vmul.f32 %v442, %v458
  %462 = vrot.lane.b32.xlu0 %v460, 32
  %v463 = vpop.permute.xlu0 %462
  %v464 = vsel %vm162, %v463, 0
  %466 = vmatprep.subr.mxu0 0.0
  %467 = vmatpush1.msra.mxu0 0.0
  %468 = vmatprep.subr.mxu0 0.0
  %469 = vmatpush1.msra.mxu0 0.0
  %470 = vmatprep.subr.mxu0 0.0
  %471 = vmatpush1.msra.mxu0 0.0
  %472 = vmatprep.subr.mxu0 0.0
  %473 = vmatpush1.msra.mxu0 0.0
  %474 = vmatprep.subr.mxu0 0.0
  %475 = vmatpush1.msra.mxu0 0.0
  %476 = vmatprep.subr.mxu0 0.0
  %477 = vmatpush1.msra.mxu0 0.0
  %478 = vmatprep.subr.mxu0 0.0
  %479 = vmatpush1.msra.mxu0 0.0
  %480 = vmatprep.subr.mxu0 0.0
  %481 = vmatpush1.msra.mxu0 0.0
  %482 = vmatprep.subr.mxu0 0.0
  %483 = vmatpush1.msra.mxu0 0.0
  %484 = vmatprep.subr.mxu0 0.0
  %485 = vmatpush1.msra.mxu0 0.0
  %486 = vmatprep.subr.mxu0 0.0
  %487 = vmatpush1.msra.mxu0 0.0
  %488 = vmatprep.subr.mxu0 0.0
  %489 = vmatpush1.msra.mxu0 0.0
  %490 = vmatprep.subr.mxu0 0.0
  %491 = vmatpush1.msra.mxu0 %v18
  %492 = vmatprep.subr.mxu0 0.0
  %493 = vmatpush1.msra.mxu0 %v17
  %494 = vmatprep.subr.mxu0 0.0
  %495 = vmatpush1.msra.mxu0 %v16
  %496 = vmatprep.subr.mxu0 0.0
  %497 = vmatpush1.msra.mxu0 %v15
  %498 = vmatprep.subr.mxu0 0.0
  %499 = vmatpush2.msra.mxu0 0.0
  %500 = vmatprep.subr.mxu0 0.0
  %501 = vmatpush2.msra.mxu0 0.0
  %502 = vmatprep.subr.mxu0 0.0
  %503 = vmatpush2.msra.mxu0 0.0
  %504 = vmatprep.subr.mxu0 0.0
  %505 = vmatpush2.msra.mxu0 0.0
  %506 = vmatprep.subr.mxu0 0.0
  %507 = vmatpush2.msra.mxu0 0.0
  %508 = vmatprep.subr.mxu0 0.0
  %509 = vmatpush2.msra.mxu0 0.0
  %510 = vmatprep.subr.mxu0 0.0
  %511 = vmatpush2.msra.mxu0 0.0
  %512 = vmatprep.subr.mxu0 0.0
  %513 = vmatpush2.msra.mxu0 0.0
  %514 = vmatprep.subr.mxu0 0.0
  %515 = vmatpush2.msra.mxu0 0.0
  %516 = vmatprep.subr.mxu0 0.0
  %517 = vmatpush2.msra.mxu0 0.0
  %518 = vmatprep.subr.mxu0 0.0
  %519 = vmatpush2.msra.mxu0 0.0
  %520 = vmatprep.subr.mxu0 0.0
  %521 = vmatpush2.msra.mxu0 0.0
  %522 = vmatprep.subr.mxu0 0.0
  %523 = vmatpush2.msra.mxu0 0.0
  %524 = vmatprep.subr.mxu0 0.0
  %525 = vmatpush2.msra.mxu0 0.0
  %526 = vmatprep.subr.mxu0 0.0
  %527 = vmatpush2.msra.mxu0 0.0
  %528 = vmatprep.subr.mxu0 0.0
  %529 = vmatpush2.msra.mxu0 0.0
  %530 = vmatprep.mubr.f32.mxu0 0.0
  %531 = vmatmul.mubr.f32.gmra.mxu0 %v464
  %v532 = vpop.f32.mrf.mxu0
  %v533 = vadd.f32 0.0, %v532
  %v534 = vpop.f32.mrf.mxu0
  %535 = vdwg.mxu0
  %v536 = vadd.f32 %v139, %v533
  %v537 = vxor.u32 %v536, 2147483648
  %v538 = vmul.f32 %v537, 1.442695
  %v539 = vpow.pop %v538
  %v540 = vadd.f32 %v539, 1.0
  %v541 = vrcp.pop %v540
  %v542 = vmul.f32 1.0, %v541
  %v543 = vtanh.pop %v536
  %v544 = vmul.f32 %v542, %v454
  %546 = vrot.lane.b32.xlu0 %v543, 64
  %v547 = vpop.permute.xlu0 %546
  %v549 = vmul.f32 %v542, %v547
  %551 = vrot.lane.b32.xlu0 %v549, 32
  %v552 = vpop.permute.xlu0 %551
  %v554 = vadd.f32 %v544, %v552
  %v555 = vtanh.pop %v554
  %557 = vrot.lane.b32.xlu0 %v555, 64
  %v558 = vpop.permute.xlu0 %557
  %v560 = vmul.f32 %v542, %v558
  %562 = vrot.lane.b32.xlu0 %v560, 32
  %v563 = vpop.permute.xlu0 %562
  %v564 = vsel %vm162, %v563, 0
  %566 = vmatprep.subr.mxu0 0.0
  %567 = vmatpush1.msra.mxu0 0.0
  %568 = vmatprep.subr.mxu0 0.0
  %569 = vmatpush1.msra.mxu0 0.0
  %570 = vmatprep.subr.mxu0 0.0
  %571 = vmatpush1.msra.mxu0 0.0
  %572 = vmatprep.subr.mxu0 0.0
  %573 = vmatpush1.msra.mxu0 0.0
  %574 = vmatprep.subr.mxu0 0.0
  %575 = vmatpush1.msra.mxu0 0.0
  %576 = vmatprep.subr.mxu0 0.0
  %577 = vmatpush1.msra.mxu0 0.0
  %578 = vmatprep.subr.mxu0 0.0
  %579 = vmatpush1.msra.mxu0 0.0
  %580 = vmatprep.subr.mxu0 0.0
  %581 = vmatpush1.msra.mxu0 0.0
  %582 = vmatprep.subr.mxu0 0.0
  %583 = vmatpush1.msra.mxu0 0.0
  %584 = vmatprep.subr.mxu0 0.0
  %585 = vmatpush1.msra.mxu0 0.0
  %586 = vmatprep.subr.mxu0 0.0
  %587 = vmatpush1.msra.mxu0 0.0
  %588 = vmatprep.subr.mxu0 0.0
  %589 = vmatpush1.msra.mxu0 0.0
  %590 = vmatprep.subr.mxu0 0.0
  %591 = vmatpush1.msra.mxu0 %v18
  %592 = vmatprep.subr.mxu0 0.0
  %593 = vmatpush1.msra.mxu0 %v17
  %594 = vmatprep.subr.mxu0 0.0
  %595 = vmatpush1.msra.mxu0 %v16
  %596 = vmatprep.subr.mxu0 0.0
  %597 = vmatpush1.msra.mxu0 %v15
  %598 = vmatprep.subr.mxu0 0.0
  %599 = vmatpush2.msra.mxu0 0.0
  %600 = vmatprep.subr.mxu0 0.0
  %601 = vmatpush2.msra.mxu0 0.0
  %602 = vmatprep.subr.mxu0 0.0
  %603 = vmatpush2.msra.mxu0 0.0
  %604 = vmatprep.subr.mxu0 0.0
  %605 = vmatpush2.msra.mxu0 0.0
  %606 = vmatprep.subr.mxu0 0.0
  %607 = vmatpush2.msra.mxu0 0.0
  %608 = vmatprep.subr.mxu0 0.0
  %609 = vmatpush2.msra.mxu0 0.0
  %610 = vmatprep.subr.mxu0 0.0
  %611 = vmatpush2.msra.mxu0 0.0
  %612 = vmatprep.subr.mxu0 0.0
  %613 = vmatpush2.msra.mxu0 0.0
  %614 = vmatprep.subr.mxu0 0.0
  %615 = vmatpush2.msra.mxu0 0.0
  %616 = vmatprep.subr.mxu0 0.0
  %617 = vmatpush2.msra.mxu0 0.0
  %618 = vmatprep.subr.mxu0 0.0
  %619 = vmatpush2.msra.mxu0 0.0
  %620 = vmatprep.subr.mxu0 0.0
  %621 = vmatpush2.msra.mxu0 0.0
  %622 = vmatprep.subr.mxu0 0.0
  %623 = vmatpush2.msra.mxu0 0.0
  %624 = vmatprep.subr.mxu0 0.0
  %625 = vmatpush2.msra.mxu0 0.0
  %626 = vmatprep.subr.mxu0 0.0
  %627 = vmatpush2.msra.mxu0 0.0
  %628 = vmatprep.subr.mxu0 0.0
  %629 = vmatpush2.msra.mxu0 0.0
  %630 = vmatprep.mubr.f32.mxu0 0.0
  %631 = vmatmul.mubr.f32.gmra.mxu0 %v564
  %v632 = vpop.f32.mrf.mxu0
  %v633 = vadd.f32 0.0, %v632
  %v634 = vpop.f32.mrf.mxu0
  %635 = vdwg.mxu0
  %v636 = vadd.f32 %v144, %v633
  %v637 = vxor.u32 %v636, 2147483648
  %v638 = vmul.f32 %v637, 1.442695
  %v639 = vpow.pop %v638
  %v640 = vadd.f32 %v639, 1.0
  %v641 = vrcp.pop %v640
  %v642 = vmul.f32 1.0, %v641
  %v643 = vtanh.pop %v636
  %v644 = vmul.f32 %v642, %v554
  %646 = vrot.lane.b32.xlu0 %v643, 64
  %v647 = vpop.permute.xlu0 %646
  %v649 = vmul.f32 %v642, %v647
  %651 = vrot.lane.b32.xlu0 %v649, 32
  %v652 = vpop.permute.xlu0 %651
  %v654 = vadd.f32 %v644, %v652
  %v655 = vtanh.pop %v654
  %657 = vrot.lane.b32.xlu0 %v655, 64
  %v658 = vpop.permute.xlu0 %657
  %v660 = vmul.f32 %v642, %v658
  %662 = vrot.lane.b32.xlu0 %v660, 32
  %v663 = vpop.permute.xlu0 %662
  %v664 = vsel %vm162, %v663, 0
  %666 = vmatprep.subr.mxu0 0.0
  %667 = vmatpush1.msra.mxu0 0.0
  %668 = vmatprep.subr.mxu0 0.0
  %669 = vmatpush1.msra.mxu0 0.0
  %670 = vmatprep.subr.mxu0 0.0
  %671 = vmatpush1.msra.mxu0 0.0
  %672 = vmatprep.subr.mxu0 0.0
  %673 = vmatpush1.msra.mxu0 0.0
  %674 = vmatprep.subr.mxu0 0.0
  %675 = vmatpush1.msra.mxu0 0.0
  %676 = vmatprep.subr.mxu0 0.0
  %677 = vmatpush1.msra.mxu0 0.0
  %678 = vmatprep.subr.mxu0 0.0
  %679 = vmatpush1.msra.mxu0 0.0
  %680 = vmatprep.subr.mxu0 0.0
  %681 = vmatpush1.msra.mxu0 0.0
  %682 = vmatprep.subr.mxu0 0.0
  %683 = vmatpush1.msra.mxu0 0.0
  %684 = vmatprep.subr.mxu0 0.0
  %685 = vmatpush1.msra.mxu0 0.0
  %686 = vmatprep.subr.mxu0 0.0
  %687 = vmatpush1.msra.mxu0 0.0
  %688 = vmatprep.subr.mxu0 0.0
  %689 = vmatpush1.msra.mxu0 0.0
  %690 = vmatprep.subr.mxu0 0.0
  %691 = vmatpush1.msra.mxu0 %v18
  %692 = vmatprep.subr.mxu0 0.0
  %693 = vmatpush1.msra.mxu0 %v17
  %694 = vmatprep.subr.mxu0 0.0
  %695 = vmatpush1.msra.mxu0 %v16
  %696 = vmatprep.subr.mxu0 0.0
  %697 = vmatpush1.msra.mxu0 %v15
  %698 = vmatprep.subr.mxu0 0.0
  %699 = vmatpush2.msra.mxu0 0.0
  %700 = vmatprep.subr.mxu0 0.0
  %701 = vmatpush2.msra.mxu0 0.0
  %702 = vmatprep.subr.mxu0 0.0
  %703 = vmatpush2.msra.mxu0 0.0
  %704 = vmatprep.subr.mxu0 0.0
  %705 = vmatpush2.msra.mxu0 0.0
  %706 = vmatprep.subr.mxu0 0.0
  %707 = vmatpush2.msra.mxu0 0.0
  %708 = vmatprep.subr.mxu0 0.0
  %709 = vmatpush2.msra.mxu0 0.0
  %710 = vmatprep.subr.mxu0 0.0
  %711 = vmatpush2.msra.mxu0 0.0
  %712 = vmatprep.subr.mxu0 0.0
  %713 = vmatpush2.msra.mxu0 0.0
  %714 = vmatprep.subr.mxu0 0.0
  %715 = vmatpush2.msra.mxu0 0.0
  %716 = vmatprep.subr.mxu0 0.0
  %717 = vmatpush2.msra.mxu0 0.0
  %718 = vmatprep.subr.mxu0 0.0
  %719 = vmatpush2.msra.mxu0 0.0
  %720 = vmatprep.subr.mxu0 0.0
  %721 = vmatpush2.msra.mxu0 0.0
  %722 = vmatprep.subr.mxu0 0.0
  %723 = vmatpush2.msra.mxu0 0.0
  %724 = vmatprep.subr.mxu0 0.0
  %725 = vmatpush2.msra.mxu0 0.0
  %726 = vmatprep.subr.mxu0 0.0
  %727 = vmatpush2.msra.mxu0 0.0
  %728 = vmatprep.subr.mxu0 0.0
  %729 = vmatpush2.msra.mxu0 0.0
  %730 = vmatprep.mubr.f32.mxu0 0.0
  %731 = vmatmul.mubr.f32.gmra.mxu0 %v664
  %v732 = vpop.f32.mrf.mxu0
  %v733 = vadd.f32 0.0, %v732
  %v734 = vpop.f32.mrf.mxu0
  %735 = vdwg.mxu0
  %v736 = vadd.f32 %v149, %v733
  %v737 = vxor.u32 %v736, 2147483648
  %v738 = vmul.f32 %v737, 1.442695
  %v739 = vpow.pop %v738
  %v740 = vadd.f32 %v739, 1.0
  %v741 = vrcp.pop %v740
  %v742 = vmul.f32 1.0, %v741
  %v743 = vtanh.pop %v736
  %v744 = vmul.f32 %v742, %v654
  %746 = vrot.lane.b32.xlu0 %v743, 64
  %v747 = vpop.permute.xlu0 %746
  %v749 = vmul.f32 %v742, %v747
  %751 = vrot.lane.b32.xlu0 %v749, 32
  %v752 = vpop.permute.xlu0 %751
  %v754 = vadd.f32 %v744, %v752
  %v755 = vtanh.pop %v754
  %757 = vrot.lane.b32.xlu0 %v755, 64
  %v758 = vpop.permute.xlu0 %757
  %v760 = vmul.f32 %v742, %v758
  %762 = vrot.lane.b32.xlu0 %v760, 32
  %v763 = vpop.permute.xlu0 %762
  %v764 = vsel %vm162, %v763, 0
  %766 = vmatprep.subr.mxu0 0.0
  %767 = vmatpush1.msra.mxu0 0.0
  %768 = vmatprep.subr.mxu0 0.0
  %769 = vmatpush1.msra.mxu0 0.0
  %770 = vmatprep.subr.mxu0 0.0
  %771 = vmatpush1.msra.mxu0 0.0
  %772 = vmatprep.subr.mxu0 0.0
  %773 = vmatpush1.msra.mxu0 0.0
  %774 = vmatprep.subr.mxu0 0.0
  %775 = vmatpush1.msra.mxu0 0.0
  %776 = vmatprep.subr.mxu0 0.0
  %777 = vmatpush1.msra.mxu0 0.0
  %778 = vmatprep.subr.mxu0 0.0
  %779 = vmatpush1.msra.mxu0 0.0
  %780 = vmatprep.subr.mxu0 0.0
  %781 = vmatpush1.msra.mxu0 0.0
  %782 = vmatprep.subr.mxu0 0.0
  %783 = vmatpush1.msra.mxu0 0.0
  %784 = vmatprep.subr.mxu0 0.0
  %785 = vmatpush1.msra.mxu0 0.0
  %786 = vmatprep.subr.mxu0 0.0
  %787 = vmatpush1.msra.mxu0 0.0
  %788 = vmatprep.subr.mxu0 0.0
  %789 = vmatpush1.msra.mxu0 0.0
  %790 = vmatprep.subr.mxu0 0.0
  %791 = vmatpush1.msra.mxu0 %v18
  %792 = vmatprep.subr.mxu0 0.0
  %793 = vmatpush1.msra.mxu0 %v17
  %794 = vmatprep.subr.mxu0 0.0
  %795 = vmatpush1.msra.mxu0 %v16
  %796 = vmatprep.subr.mxu0 0.0
  %797 = vmatpush1.msra.mxu0 %v15
  %798 = vmatprep.subr.mxu0 0.0
  %799 = vmatpush2.msra.mxu0 0.0
  %800 = vmatprep.subr.mxu0 0.0
  %801 = vmatpush2.msra.mxu0 0.0
  %802 = vmatprep.subr.mxu0 0.0
  %803 = vmatpush2.msra.mxu0 0.0
  %804 = vmatprep.subr.mxu0 0.0
  %805 = vmatpush2.msra.mxu0 0.0
  %806 = vmatprep.subr.mxu0 0.0
  %807 = vmatpush2.msra.mxu0 0.0
  %808 = vmatprep.subr.mxu0 0.0
  %809 = vmatpush2.msra.mxu0 0.0
  %810 = vmatprep.subr.mxu0 0.0
  %811 = vmatpush2.msra.mxu0 0.0
  %812 = vmatprep.subr.mxu0 0.0
  %813 = vmatpush2.msra.mxu0 0.0
  %814 = vmatprep.subr.mxu0 0.0
  %815 = vmatpush2.msra.mxu0 0.0
  %816 = vmatprep.subr.mxu0 0.0
  %817 = vmatpush2.msra.mxu0 0.0
  %818 = vmatprep.subr.mxu0 0.0
  %819 = vmatpush2.msra.mxu0 0.0
  %820 = vmatprep.subr.mxu0 0.0
  %821 = vmatpush2.msra.mxu0 0.0
  %822 = vmatprep.subr.mxu0 0.0
  %823 = vmatpush2.msra.mxu0 0.0
  %824 = vmatprep.subr.mxu0 0.0
  %825 = vmatpush2.msra.mxu0 0.0
  %826 = vmatprep.subr.mxu0 0.0
  %827 = vmatpush2.msra.mxu0 0.0
  %828 = vmatprep.subr.mxu0 0.0
  %829 = vmatpush2.msra.mxu0 0.0
  %830 = vmatprep.mubr.f32.mxu0 0.0
  %831 = vmatmul.mubr.f32.gmra.mxu0 %v764
  %v832 = vpop.f32.mrf.mxu0
  %v833 = vadd.f32 0.0, %v832
  %v834 = vpop.f32.mrf.mxu0
  %835 = vdwg.mxu0
  %v836 = vadd.f32 %v154, %v833
  %v837 = vxor.u32 %v836, 2147483648
  %v838 = vmul.f32 %v837, 1.442695
  %v839 = vpow.pop %v838
  %v840 = vadd.f32 %v839, 1.0
  %v841 = vrcp.pop %v840
  %v842 = vmul.f32 1.0, %v841
  %v843 = vtanh.pop %v836
  %v844 = vmul.f32 %v842, %v754
  %846 = vrot.lane.b32.xlu0 %v843, 64
  %v847 = vpop.permute.xlu0 %846
  %v849 = vmul.f32 %v842, %v847
  %851 = vrot.lane.b32.xlu0 %v849, 32
  %v852 = vpop.permute.xlu0 %851
  %v854 = vadd.f32 %v844, %v852
  %v855 = vtanh.pop %v854
  %857 = vrot.lane.b32.xlu0 %v855, 64
  %v858 = vpop.permute.xlu0 %857
  %v860 = vmul.f32 %v842, %v858
  %862 = vrot.lane.b32.xlu0 %v860, 32
  %v863 = vpop.permute.xlu0 %862
  %v864 = vsel %vm162, %v863, 0
  %866 = vmatprep.subr.mxu0 0.0
  %867 = vmatpush1.msra.mxu0 0.0
  %868 = vmatprep.subr.mxu0 0.0
  %869 = vmatpush1.msra.mxu0 0.0
  %870 = vmatprep.subr.mxu0 0.0
  %871 = vmatpush1.msra.mxu0 0.0
  %872 = vmatprep.subr.mxu0 0.0
  %873 = vmatpush1.msra.mxu0 0.0
  %874 = vmatprep.subr.mxu0 0.0
  %875 = vmatpush1.msra.mxu0 0.0
  %876 = vmatprep.subr.mxu0 0.0
  %877 = vmatpush1.msra.mxu0 0.0
  %878 = vmatprep.subr.mxu0 0.0
  %879 = vmatpush1.msra.mxu0 0.0
  %880 = vmatprep.subr.mxu0 0.0
  %881 = vmatpush1.msra.mxu0 0.0
  %882 = vmatprep.subr.mxu0 0.0
  %883 = vmatpush1.msra.mxu0 0.0
  %884 = vmatprep.subr.mxu0 0.0
  %885 = vmatpush1.msra.mxu0 0.0
  %886 = vmatprep.subr.mxu0 0.0
  %887 = vmatpush1.msra.mxu0 0.0
  %888 = vmatprep.subr.mxu0 0.0
  %889 = vmatpush1.msra.mxu0 0.0
  %890 = vmatprep.subr.mxu0 0.0
  %891 = vmatpush1.msra.mxu0 %v18
  %892 = vmatprep.subr.mxu0 0.0
  %893 = vmatpush1.msra.mxu0 %v17
  %894 = vmatprep.subr.mxu0 0.0
  %895 = vmatpush1.msra.mxu0 %v16
  %896 = vmatprep.subr.mxu0 0.0
  %897 = vmatpush1.msra.mxu0 %v15
  %898 = vmatprep.subr.mxu0 0.0
  %899 = vmatpush2.msra.mxu0 0.0
  %900 = vmatprep.subr.mxu0 0.0
  %901 = vmatpush2.msra.mxu0 0.0
  %902 = vmatprep.subr.mxu0 0.0
  %903 = vmatpush2.msra.mxu0 0.0
  %904 = vmatprep.subr.mxu0 0.0
  %905 = vmatpush2.msra.mxu0 0.0
  %906 = vmatprep.subr.mxu0 0.0
  %907 = vmatpush2.msra.mxu0 0.0
  %908 = vmatprep.subr.mxu0 0.0
  %909 = vmatpush2.msra.mxu0 0.0
  %910 = vmatprep.subr.mxu0 0.0
  %911 = vmatpush2.msra.mxu0 0.0
  %912 = vmatprep.subr.mxu0 0.0
  %913 = vmatpush2.msra.mxu0 0.0
  %914 = vmatprep.subr.mxu0 0.0
  %915 = vmatpush2.msra.mxu0 0.0
  %916 = vmatprep.subr.mxu0 0.0
  %917 = vmatpush2.msra.mxu0 0.0
  %918 = vmatprep.subr.mxu0 0.0
  %919 = vmatpush2.msra.mxu0 0.0
  %920 = vmatprep.subr.mxu0 0.0
  %921 = vmatpush2.msra.mxu0 0.0
  %922 = vmatprep.subr.mxu0 0.0
  %923 = vmatpush2.msra.mxu0 0.0
  %924 = vmatprep.subr.mxu0 0.0
  %925 = vmatpush2.msra.mxu0 0.0
  %926 = vmatprep.subr.mxu0 0.0
  %927 = vmatpush2.msra.mxu0 0.0
  %928 = vmatprep.subr.mxu0 0.0
  %929 = vmatpush2.msra.mxu0 0.0
  %930 = vmatprep.mubr.f32.mxu0 0.0
  %931 = vmatmul.mubr.f32.gmra.mxu0 %v864
  %v932 = vpop.f32.mrf.mxu0
  %v933 = vadd.f32 0.0, %v932
  %v934 = vpop.f32.mrf.mxu0
  %935 = vdwg.mxu0
  %v936 = vadd.f32 %v159, %v933
  %v937 = vxor.u32 %v936, 2147483648
  %v938 = vmul.f32 %v937, 1.442695
  %v939 = vpow.pop %v938
  %v940 = vadd.f32 %v939, 1.0
  %v941 = vrcp.pop %v940
  %v942 = vmul.f32 1.0, %v941
  %v943 = vtanh.pop %v936
  %v944 = vmul.f32 %v942, %v854
  %946 = vrot.lane.b32.xlu0 %v943, 64
  %v947 = vpop.permute.xlu0 %946
  %v949 = vmul.f32 %v942, %v947
  %951 = vrot.lane.b32.xlu0 %v949, 32
  %v952 = vpop.permute.xlu0 %951
  %v954 = vadd.f32 %v944, %v952
  %v955 = vtanh.pop %v954
  %957 = vrot.lane.b32.xlu0 %v955, 64
  %v958 = vpop.permute.xlu0 %957
  %v960 = vmul.f32 %v942, %v958
  %v961 = vld [vmem:[%s1 + $0x28] sm:$0xff]
  %v962 = vld [vmem:[%s1 + $0x30] sm:$0xff]
  %v963 = vld [vmem:[%s1 + $0x38] sm:$0xff]
  %v964 = vld [vmem:[%s1 + $0x40] sm:$0xff]
  %v965 = vld [vmem:[%s1 + $0x48] sm:$0xff]
  %v966 = vld [vmem:[%s1 + $0x50] sm:$0xff]
  %v967 = vld [vmem:[%s1 + $0x58] sm:$0xff]
  %v968 = vld [vmem:[%s1 + $0x60] sm:$0xff]
  %v969 = vld [vmem:[%s1 + $0x68] sm:$0xff]
  %v970 = vld [vmem:[%s1 + $0x70] sm:$0xff]
  %v971 = vld [vmem:[%s1 + $0x78] sm:$0xff]
  %v972 = vld [vmem:[%s1 + $0x80] sm:$0xff]
  %v973 = vld [vmem:[%s1 + $0x88] sm:$0xff]
  %v974 = vld [vmem:[%s1 + $0x90] sm:$0xff]
  %v975 = vld [vmem:[%s1 + $0x98] sm:$0xff]
  %v976 = vld [vmem:[%s1 + $0xa0] sm:$0xff]
  %v977 = vld [vmem:[%s1 + $0xa8] sm:$0xff]
  %v978 = vld [vmem:[%s1 + $0xb0] sm:$0xff]
  %v979 = vld [vmem:[%s1 + $0xb8] sm:$0xff]
  %v980 = vld [vmem:[%s1 + $0xc0] sm:$0xff]
  %v981 = vlaneseq
  %v982 = vshrl.u32 %v981, 7
  %v983 = vsub.s32 1, %v982
  %v984 = vrot.slane %v19, %v983
  %986 = vrot.lane.b32.xlu0 %v960, 32
  %v987 = vpop.permute.xlu0 %986
  %v988 = vsel %vm162, %v987, 0
  %990 = vmatprep.subr.mxu0 0.0
  %991 = vmatpush1.msra.mxu0 0.0
  %992 = vmatprep.subr.mxu0 0.0
  %993 = vmatpush1.msra.mxu0 0.0
  %994 = vmatprep.subr.mxu0 0.0
  %995 = vmatpush1.msra.mxu0 0.0
  %996 = vmatprep.subr.mxu0 0.0
  %997 = vmatpush1.msra.mxu0 0.0
  %998 = vmatprep.subr.mxu0 0.0
  %999 = vmatpush1.msra.mxu0 0.0
  %1000 = vmatprep.subr.mxu0 0.0
  %1001 = vmatpush1.msra.mxu0 0.0
  %1002 = vmatprep.subr.mxu0 0.0
  %1003 = vmatpush1.msra.mxu0 0.0
  %1004 = vmatprep.subr.mxu0 0.0
  %1005 = vmatpush1.msra.mxu0 0.0
  %1006 = vmatprep.subr.mxu0 0.0
  %1007 = vmatpush1.msra.mxu0 0.0
  %1008 = vmatprep.subr.mxu0 0.0
  %1009 = vmatpush1.msra.mxu0 0.0
  %1010 = vmatprep.subr.mxu0 0.0
  %1011 = vmatpush1.msra.mxu0 0.0
  %1012 = vmatprep.subr.mxu0 0.0
  %1013 = vmatpush1.msra.mxu0 0.0
  %1014 = vmatprep.subr.mxu0 0.0
  %1015 = vmatpush1.msra.mxu0 %v964
  %1016 = vmatprep.subr.mxu0 0.0
  %1017 = vmatpush1.msra.mxu0 %v963
  %1018 = vmatprep.subr.mxu0 0.0
  %1019 = vmatpush1.msra.mxu0 %v962
  %1020 = vmatprep.subr.mxu0 0.0
  %1021 = vmatpush1.msra.mxu0 %v961
  %1022 = vmatprep.subr.mxu0 0.0
  %1023 = vmatpush2.msra.mxu0 0.0
  %1024 = vmatprep.subr.mxu0 0.0
  %1025 = vmatpush2.msra.mxu0 0.0
  %1026 = vmatprep.subr.mxu0 0.0
  %1027 = vmatpush2.msra.mxu0 0.0
  %1028 = vmatprep.subr.mxu0 0.0
  %1029 = vmatpush2.msra.mxu0 0.0
  %1030 = vmatprep.subr.mxu0 0.0
  %1031 = vmatpush2.msra.mxu0 0.0
  %1032 = vmatprep.subr.mxu0 0.0
  %1033 = vmatpush2.msra.mxu0 0.0
  %1034 = vmatprep.subr.mxu0 0.0
  %1035 = vmatpush2.msra.mxu0 0.0
  %1036 = vmatprep.subr.mxu0 0.0
  %1037 = vmatpush2.msra.mxu0 0.0
  %1038 = vmatprep.subr.mxu0 0.0
  %1039 = vmatpush2.msra.mxu0 0.0
  %1040 = vmatprep.subr.mxu0 0.0
  %1041 = vmatpush2.msra.mxu0 0.0
  %1042 = vmatprep.subr.mxu0 0.0
  %1043 = vmatpush2.msra.mxu0 0.0
  %1044 = vmatprep.subr.mxu0 0.0
  %1045 = vmatpush2.msra.mxu0 0.0
  %1046 = vmatprep.subr.mxu0 0.0
  %1047 = vmatpush2.msra.mxu0 0.0
  %1048 = vmatprep.subr.mxu0 0.0
  %1049 = vmatpush2.msra.mxu0 0.0
  %1050 = vmatprep.subr.mxu0 0.0
  %1051 = vmatpush2.msra.mxu0 0.0
  %1052 = vmatprep.subr.mxu0 0.0
  %1053 = vmatpush2.msra.mxu0 0.0
  %1054 = vmatprep.mubr.f32.mxu0 0.0
  %1055 = vmatmul.mubr.f32.gmra.mxu0 %v988
  %v1056 = vpop.f32.mrf.mxu0
  %v1057 = vadd.f32 %v984, %v1056
  %v1058 = vpop.f32.mrf.mxu0
  %1059 = vdwg.mxu0
  %v1060 = vmax.f32 %v1057, 0.0
  %v1061 = vlaneseq
  %v1062 = vshrl.u32 %v1061, 7
  %v1063 = vsub.s32 2, %v1062
  %v1064 = vrot.slane %v19, %v1063
  %v1065 = vmul.f32 %v1060, %v1064
  %v1066 = vlaneseq
  %v1067 = vshrl.u32 %v1066, 7
  %v1068 = vsub.s32 3, %v1067
  %v1069 = vrot.slane %v19, %v1068
  %v1070 = vadd.f32 %v1065, %v1069
  %v1071 = vlaneseq
  %v1072 = vshrl.u32 %v1071, 7
  %v1073 = vsub.s32 4, %v1072
  %v1074 = vrot.slane %v19, %v1073
  %1075 = vmatprep.subr.mxu0 0.0
  %1076 = vmatpush1.msra.mxu0 %v980
  %1077 = vmatprep.subr.mxu0 0.0
  %1078 = vmatpush1.msra.mxu0 %v979
  %1079 = vmatprep.subr.mxu0 0.0
  %1080 = vmatpush1.msra.mxu0 %v978
  %1081 = vmatprep.subr.mxu0 0.0
  %1082 = vmatpush1.msra.mxu0 %v977
  %1083 = vmatprep.subr.mxu0 0.0
  %1084 = vmatpush1.msra.mxu0 %v976
  %1085 = vmatprep.subr.mxu0 0.0
  %1086 = vmatpush1.msra.mxu0 %v975
  %1087 = vmatprep.subr.mxu0 0.0
  %1088 = vmatpush1.msra.mxu0 %v974
  %1089 = vmatprep.subr.mxu0 0.0
  %1090 = vmatpush1.msra.mxu0 %v973
  %1091 = vmatprep.subr.mxu0 0.0
  %1092 = vmatpush1.msra.mxu0 %v972
  %1093 = vmatprep.subr.mxu0 0.0
  %1094 = vmatpush1.msra.mxu0 %v971
  %1095 = vmatprep.subr.mxu0 0.0
  %1096 = vmatpush1.msra.mxu0 %v970
  %1097 = vmatprep.subr.mxu0 0.0
  %1098 = vmatpush1.msra.mxu0 %v969
  %1099 = vmatprep.subr.mxu0 0.0
  %1100 = vmatpush1.msra.mxu0 %v968
  %1101 = vmatprep.subr.mxu0 0.0
  %1102 = vmatpush1.msra.mxu0 %v967
  %1103 = vmatprep.subr.mxu0 0.0
  %1104 = vmatpush1.msra.mxu0 %v966
  %1105 = vmatprep.subr.mxu0 0.0
  %1106 = vmatpush1.msra.mxu0 %v965
  %1107 = vmatprep.subr.mxu0 0.0
  %1108 = vmatpush2.msra.mxu0 0.0
  %1109 = vmatprep.subr.mxu0 0.0
  %1110 = vmatpush2.msra.mxu0 0.0
  %1111 = vmatprep.subr.mxu0 0.0
  %1112 = vmatpush2.msra.mxu0 0.0
  %1113 = vmatprep.subr.mxu0 0.0
  %1114 = vmatpush2.msra.mxu0 0.0
  %1115 = vmatprep.subr.mxu0 0.0
  %1116 = vmatpush2.msra.mxu0 0.0
  %1117 = vmatprep.subr.mxu0 0.0
  %1118 = vmatpush2.msra.mxu0 0.0
  %1119 = vmatprep.subr.mxu0 0.0
  %1120 = vmatpush2.msra.mxu0 0.0
  %1121 = vmatprep.subr.mxu0 0.0
  %1122 = vmatpush2.msra.mxu0 0.0
  %1123 = vmatprep.subr.mxu0 0.0
  %1124 = vmatpush2.msra.mxu0 0.0
  %1125 = vmatprep.subr.mxu0 0.0
  %1126 = vmatpush2.msra.mxu0 0.0
  %1127 = vmatprep.subr.mxu0 0.0
  %1128 = vmatpush2.msra.mxu0 0.0
  %1129 = vmatprep.subr.mxu0 0.0
  %1130 = vmatpush2.msra.mxu0 0.0
  %1131 = vmatprep.subr.mxu0 0.0
  %1132 = vmatpush2.msra.mxu0 0.0
  %1133 = vmatprep.subr.mxu0 0.0
  %1134 = vmatpush2.msra.mxu0 0.0
  %1135 = vmatprep.subr.mxu0 0.0
  %1136 = vmatpush2.msra.mxu0 0.0
  %1137 = vmatprep.subr.mxu0 0.0
  %1138 = vmatpush2.msra.mxu0 0.0
  %1139 = vmatprep.mubr.f32.mxu0 0.0
  %1140 = vmatmul.mubr.f32.gmra.mxu0 %v1070
  %v1141 = vpop.f32.mrf.mxu0
  %v1142 = vadd.f32 %v1074, %v1141
  %v1143 = vpop.f32.mrf.mxu0
  %1144 = vdwg.mxu0
  %1145 = vst [vmem:[%s3] sm:$0xff] %v1142
  // Predicated region
  $region14: #{lstm_classifier_forward.1} parent=0 // pred_check
    _
  $region15: #{lstm_classifier_forward.1} parent=0 // pred_check_branch
    %1147 = sbr.rel (0) target = $region17
  $region16: #{lstm_classifier_forward.1} parent=0 // pred_region
    _
  $region17: #{lstm_classifier_forward.1} parent=0 // pred_fallthru
    _
  // Predicated region
  $region18: #{lstm_classifier_forward.1} parent=0 // pred_check
    _
  $region19: #{lstm_classifier_forward.1} parent=0 // pred_check_branch
    %1149 = sbr.rel (0) target = $region21
  $region20: #{lstm_classifier_forward.1} parent=0 // pred_region
    _
  $region21: #{lstm_classifier_forward.1} parent=0 // pred_fallthru
    _

</llo_original>
